<compile_context>
chip_gen: v7x
topology: tpu7x:2x2x1
jax: 0.10.0
libtpu: 0.0.40
codegen_flags: <defaults>
</compile_context>

<pallas_src>
import functools

import jax
import jax.numpy as jnp
from jax.experimental import pallas as pl
from jax.experimental.pallas import tpu as pltpu


# ----------------------------------------------------------------------------
# Kernel
# ----------------------------------------------------------------------------
def tarnet_kernel(x_ref,
                  wphi_ref, bphi_ref,
                  wh1_ref, bh1_ref,
                  wh2_ref, bh2_ref,
                  out0_ref, out1_ref, phi_ref, *, h2):
    x = x_ref[...]                                   # (F, TB) -- batch on lanes
    if x.dtype != wphi_ref.dtype:                    # static check; in-kernel cast
        x = x.astype(wphi_ref.dtype)

    # ---- shared representation: phi_T = ReLU(Wphi @ x_T + bphi) -- (H0, TB) ----
    # f32 accumulation on the MXU; bias/ReLU in f32 (works on every generation).
    phi = jnp.dot(wphi_ref[...], x, preferred_element_type=jnp.float32)
    phi = jnp.maximum(phi + bphi_ref[...], 0.0)
    # Dropout(p=0.0) is the identity -> no-op.

    # ---- fused heads: [h0; h1]_T = ReLU([W01; W11] @ phi_T + [b01; b11]) -------
    h = jnp.dot(wh1_ref[...], phi.astype(wh1_ref.dtype),
                preferred_element_type=jnp.float32)
    h = jnp.maximum(h + bh1_ref[...], 0.0)

    # ---- [o0; o1]_T = blockdiag(W02, W12) @ [h0; h1]_T + [b02; b12] ------------
    o = jnp.dot(wh2_ref[...], h.astype(wh2_ref.dtype),
                preferred_element_type=jnp.float32) + bh2_ref[...]

    # ---- lane-dense (full TB-lane-wide) stores, one per logical output ---------
    out0_ref[...] = o[:h2].astype(out0_ref.dtype)
    out1_ref[...] = o[h2:].astype(out1_ref.dtype)
    phi_ref[...] = phi.astype(phi_ref.dtype)
    # activations[2] is None in this instantiation -> no final head activation.


# ----------------------------------------------------------------------------
# Parameter packing (done once, outside the kernel)
# ----------------------------------------------------------------------------
def _round_up(n, m):
    return ((n + m - 1) // m) * m


def pack_params(params, compute_dtype):
    """Pack both heads into one transposed matmul chain.

    Params are in PyTorch-native layout: w* is (out_features, in_features),
    b* is (out_features,).
    """
    H1 = params["w01"].shape[0]
    H2 = params["w02"].shape[0]
    z = jnp.zeros((H2, H1), dtype=params["w02"].dtype)
    wh2 = jnp.concatenate(
        [jnp.concatenate([params["w02"], z], axis=1),
         jnp.concatenate([z, params["w12"]], axis=1)], axis=0)   # (2*H2, 2*H1)

    def col(b):                                      # (H,) -> (H, 1) f32 column
        return jnp.reshape(b, (-1, 1)).astype(jnp.float32)

    return dict(
        wphi=params["wphi"].astype(compute_dtype),                      # (H0, F)
        bphi=col(params["bphi"]),
        wh1=jnp.concatenate([params["w01"], params["w11"]],
                            axis=0).astype(compute_dtype),              # (2*H1, H0)
        bh1=col(jnp.concatenate([params["b01"], params["b11"]], axis=0)),
        wh2=wh2.astype(compute_dtype),                                  # (2*H2, 2*H1)
        bh2=col(jnp.concatenate([params["b02"], params["b12"]], axis=0)),
    )


# ----------------------------------------------------------------------------
# Wrapper
# ----------------------------------------------------------------------------
def tarnet_forward(x, params, *, block_b=4096, compute_dtype=None,
                   head_dtype=None, phi_dtype=None,
                   x_is_transposed=False, transposed_outputs=False,
                   core_parallel=False, vmem_limit_bytes=None):
    """TARNet forward.  Returns (out0, out1, phi) like the PyTorch module.

    compute_dtype:      dtype of the weights fed to the MXU (bf16 is fine on
                        v5e/v6e/v7x; accumulation is always f32).  For the
                        input-read saving, supply x already in that dtype.
    head_dtype/phi_dtype: output stream dtypes (bf16 phi halves ~80% of the
                        output HBM writes on v6e/v7x).
    x_is_transposed:    pass x as (F, B) to skip the wrapper relayout pass.
    transposed_outputs: return (H, B)-shaped outputs, skipping back-transposes.
    core_parallel:      set True on v7x (2 TensorCores/chip) to split the
                        batch-tile loop across cores via CORE_PARALLEL.
    """
    if x_is_transposed:
        F, B = x.shape
        x_t = x
    else:
        B, F = x.shape
        x_t = x.T            # only wrapper relayout pass; avoid via x_is_transposed

    if compute_dtype is None:
        compute_dtype = x.dtype
    if head_dtype is None:
        head_dtype = x.dtype
    if phi_dtype is None:
        phi_dtype = x.dtype

    H0 = params["wphi"].shape[0]
    H2 = params["w02"].shape[0]
    p = pack_params(params, compute_dtype)
    weights = (p["wphi"], p["bphi"], p["wh1"], p["bh1"], p["wh2"], p["bh2"])

    # Batch tile on the lane axis: multiple of 128, capped at block_b.  A ragged
    # final tile is handled by Pallas partial-block masking (reads of the
    # out-of-bounds lanes are garbage but stay confined to their lanes; the
    # corresponding output lanes are dropped) -- no jnp.pad / [:B] passes.
    TB = min(_round_up(block_b, 128), _round_up(B, 128))
    grid = (pl.cdiv(B, TB),)

    def lane_spec(rows):
        return pl.BlockSpec((rows, TB), lambda i: (0, i))

    def resident_spec(a):
        # Constant index_map -> fetched once, VMEM-resident across all steps.
        return pl.BlockSpec(a.shape, lambda i: (0,) * a.ndim)

    out_shapes = (jax.ShapeDtypeStruct((H2, B), head_dtype),
                  jax.ShapeDtypeStruct((H2, B), head_dtype),
                  jax.ShapeDtypeStruct((H0, B), phi_dtype))
    out_specs = (lane_spec(H2), lane_spec(H2), lane_spec(H0))

    # VMEM budget (sublane-padded, lane-dense): ~0.5 KB/row for double-buffered
    # I/O tiles + f32 intermediates; only raise the scoped limit when needed
    # (matters for v5e's 16 MiB default with very large tiles).
    def _pad8(n):
        return _round_up(n, 8)
    io_bytes = 2 * TB * 4 * (_pad8(F) + 2 * _pad8(H2) + _pad8(H0))
    vmem_est = io_bytes + TB * 4 * (H0 + p["wh1"].shape[0]) + (1 << 20)
    if vmem_limit_bytes is None and vmem_est > 12 * 1024 * 1024:
        vmem_limit_bytes = int(min(2 * vmem_est, 48 * 1024 * 1024))

    flops = 2 * B * (F * H0
                     + H0 * p["wh1"].shape[0]
                     + p["wh1"].shape[0] * p["wh2"].shape[0])
    bytes_accessed = (x_t.size * x_t.dtype.itemsize
                      + sum(int(w.size) * w.dtype.itemsize for w in weights)
                      + 2 * H2 * B * jnp.dtype(head_dtype).itemsize
                      + H0 * B * jnp.dtype(phi_dtype).itemsize)

    batch_sem = pltpu.CORE_PARALLEL if core_parallel else pltpu.PARALLEL

    out0_t, out1_t, phi_t = pl.pallas_call(
        functools.partial(tarnet_kernel, h2=H2),
        grid=grid,
        in_specs=[lane_spec(F)] + [resident_spec(w) for w in weights],
        out_specs=out_specs,
        out_shape=out_shapes,
        compiler_params=pltpu.CompilerParams(
            dimension_semantics=(batch_sem,),
            vmem_limit_bytes=vmem_limit_bytes),
        cost_estimate=pl.CostEstimate(
            flops=int(flops), transcendentals=0,
            bytes_accessed=int(bytes_accessed)),
    )(x_t, *weights)

    if transposed_outputs:
        return out0_t, out1_t, phi_t
    return out0_t.T, out1_t.T, phi_t.T


# ----------------------------------------------------------------------------
# Deterministic init + pure-JAX reference
# ----------------------------------------------------------------------------
def init_params(key, input_size, net_layers):
    """PyTorch-Linear-style uniform init; weights in PyTorch (out, in) layout."""
    H0, H1, H2 = net_layers
    dims = [("wphi", (H0, input_size)), ("bphi", (H0,)),
            ("w01", (H1, H0)), ("b01", (H1,)),
            ("w02", (H2, H1)), ("b02", (H2,)),
            ("w11", (H1, H0)), ("b11", (H1,)),
            ("w12", (H2, H1)), ("b12", (H2,))]
    fan_in = {"wphi": input_size, "bphi": input_size,
              "w01": H0, "b01": H0, "w02": H1, "b02": H1,
              "w11": H0, "b11": H0, "w12": H1, "b12": H1}
    params = {}
    for name, shape in dims:
        key, sub = jax.random.split(key)
        bound = 1.0 / (float(fan_in[name]) ** 0.5)
        params[name] = jax.random.uniform(
            sub, shape, dtype=jnp.float32, minval=-bound, maxval=bound)
    return params


def tarnet_reference(x, p):
    hp = jax.lax.Precision.HIGHEST
    relu = lambda v: jnp.maximum(v, 0.0)
    phi = relu(jnp.dot(x, p["wphi"].T, precision=hp) + p["bphi"])
    h0 = relu(jnp.dot(phi, p["w01"].T, precision=hp) + p["b01"])
    o0 = jnp.dot(h0, p["w02"].T, precision=hp) + p["b02"]
    h1 = relu(jnp.dot(phi, p["w11"].T, precision=hp) + p["b11"])
    o1 = jnp.dot(h1, p["w12"].T, precision=hp) + p["b12"]
    return o0, o1, phi


# ----------------------------------------------------------------------------
# Demo / self-test
# ----------------------------------------------------------------------------
if __name__ == "__main__":
    key = jax.random.PRNGKey(0)
    k_x, k_p = jax.random.split(key)

    batch, input_size = 256, 16
    net_layers = [32, 16, 4]                  # [H0, H1, H2]

    x = jax.random.normal(k_x, (batch, input_size), dtype=jnp.float32)
    params = init_params(k_p, input_size, net_layers)
    r0, r1, rphi = tarnet_reference(x, params)

    # ---- f32 path; block_b=128 so the 1-D batch grid takes several steps ----
    out0, out1, phi = tarnet_forward(x, params, block_b=128)
    jax.block_until_ready((out0, out1, phi))
    assert out0.shape == (batch, 4) and out1.shape == (batch, 4) and phi.shape == (batch, 32)
    assert jnp.allclose(out0, r0, atol=1e-4), "head0 mismatch (f32)"
    assert jnp.allclose(out1, r1, atol=1e-4), "head1 mismatch (f32)"
    assert jnp.allclose(phi, rphi, atol=1e-4), "phi mismatch (f32)"

    # ---- ragged batch (not a multiple of the 128-lane tile): exercises the
    # masked final block with no wrapper-side padding/slicing passes ----------
    xr = x[:200]
    rr0, rr1, rrphi = tarnet_reference(xr, params)
    q0, q1, qphi = tarnet_forward(xr, params, block_b=128)
    jax.block_until_ready((q0, q1, qphi))
    assert jnp.allclose(q0, rr0, atol=1e-4), "head0 mismatch (ragged)"
    assert jnp.allclose(q1, rr1, atol=1e-4), "head1 mismatch (ragged)"
    assert jnp.allclose(qphi, rrphi, atol=1e-4), "phi mismatch (ragged)"

    # ---- bf16 MXU inputs (valid on v5e too; accumulation stays f32) with the
    # dominant phi output stream stored in bf16 (v6e/v7x write-byte saving) ----
    b0, b1, bphi = tarnet_forward(x, params, block_b=128,
                                  compute_dtype=jnp.bfloat16,
                                  phi_dtype=jnp.bfloat16)
    jax.block_until_ready((b0, b1, bphi))
    assert jnp.allclose(b0, r0, atol=5e-2), "head0 mismatch (bf16)"
    assert jnp.allclose(b1, r1, atol=5e-2), "head1 mismatch (bf16)"
    assert jnp.allclose(bphi.astype(jnp.float32), rphi, atol=5e-2), "phi mismatch (bf16)"

    print("KERNEL_OK")
</pallas_src>

<mosaic_0001>
module attributes {stable_mosaic.version = 11 : i64} {
  func.func @tarnet_kernel(%arg0: i32, %arg1: memref<16x128xf32, #tpu.memory_space<vmem>>, %arg2: memref<32x16xf32, #tpu.memory_space<vmem>>, %arg3: memref<32x1xf32, #tpu.memory_space<vmem>>, %arg4: memref<32x32xf32, #tpu.memory_space<vmem>>, %arg5: memref<32x1xf32, #tpu.memory_space<vmem>>, %arg6: memref<8x32xf32, #tpu.memory_space<vmem>>, %arg7: memref<8x1xf32, #tpu.memory_space<vmem>>, %arg8: memref<4x128xf32, #tpu.memory_space<vmem>>, %arg9: memref<4x128xf32, #tpu.memory_space<vmem>>, %arg10: memref<32x128xf32, #tpu.memory_space<vmem>>) attributes {dimension_semantics = [#tpu.dimension_semantics<parallel>], iteration_bounds = array<i64: 2>, scalar_prefetch = 0 : i64, scratch_operands = 0 : i64, tpu.core_type = #tpu.core_type<tc>, window_params = [{transform_indices = @transform_0, window_bounds = array<i64: 16, 128>}, {pipeline_mode = #tpu.pipeline_mode<synchronous>, transform_indices = @transform_1, window_bounds = array<i64: 32, 16>}, {pipeline_mode = #tpu.pipeline_mode<synchronous>, transform_indices = @transform_2, window_bounds = array<i64: 32, 1>}, {pipeline_mode = #tpu.pipeline_mode<synchronous>, transform_indices = @transform_3, window_bounds = array<i64: 32, 32>}, {pipeline_mode = #tpu.pipeline_mode<synchronous>, transform_indices = @transform_4, window_bounds = array<i64: 32, 1>}, {pipeline_mode = #tpu.pipeline_mode<synchronous>, transform_indices = @transform_5, window_bounds = array<i64: 8, 32>}, {pipeline_mode = #tpu.pipeline_mode<synchronous>, transform_indices = @transform_6, window_bounds = array<i64: 8, 1>}, {transform_indices = @transform_7, window_bounds = array<i64: 4, 128>}, {transform_indices = @transform_8, window_bounds = array<i64: 4, 128>}, {transform_indices = @transform_9, window_bounds = array<i64: 32, 128>}]} {
    %c0 = arith.constant 0 : index
    %c0_0 = arith.constant 0 : index
    %0 = vector.load %arg1[%c0, %c0_0] : memref<16x128xf32, #tpu.memory_space<vmem>>, vector<16x128xf32>
    %c0_1 = arith.constant 0 : index
    %c0_2 = arith.constant 0 : index
    %1 = vector.load %arg2[%c0_1, %c0_2] : memref<32x16xf32, #tpu.memory_space<vmem>>, vector<32x16xf32>
    %cst = arith.constant dense<0.000000e+00> : vector<32x128xf32>
    %2 = tpu.matmul %1, %0, %cst {dimension_numbers = #tpu.dot_dimension_numbers<[1], [0], [0], [1], [0, 0, 1, 1], [], []>} : vector<32x16xf32>, vector<16x128xf32>, vector<32x128xf32> -> vector<32x128xf32>
    %c0_3 = arith.constant 0 : index
    %c0_4 = arith.constant 0 : index
    %3 = vector.load %arg3[%c0_3, %c0_4] : memref<32x1xf32, #tpu.memory_space<vmem>>, vector<32x1xf32>
    %4 = vector.broadcast %3 : vector<32x1xf32> to vector<32x128xf32>
    %5 = arith.addf %2, %4 : vector<32x128xf32>
    %cst_5 = arith.constant 0.000000e+00 : f32
    %6 = vector.broadcast %cst_5 : f32 to vector<32x128xf32>
    %7 = arith.maximumf %5, %6 : vector<32x128xf32>
    %c0_6 = arith.constant 0 : index
    %c0_7 = arith.constant 0 : index
    %8 = vector.load %arg4[%c0_6, %c0_7] : memref<32x32xf32, #tpu.memory_space<vmem>>, vector<32x32xf32>
    %cst_8 = arith.constant dense<0.000000e+00> : vector<32x128xf32>
    %9 = tpu.matmul %8, %7, %cst_8 {dimension_numbers = #tpu.dot_dimension_numbers<[1], [0], [0], [1], [0, 0, 1, 1], [], []>} : vector<32x32xf32>, vector<32x128xf32>, vector<32x128xf32> -> vector<32x128xf32>
    %c0_9 = arith.constant 0 : index
    %c0_10 = arith.constant 0 : index
    %10 = vector.load %arg5[%c0_9, %c0_10] : memref<32x1xf32, #tpu.memory_space<vmem>>, vector<32x1xf32>
    %11 = vector.broadcast %10 : vector<32x1xf32> to vector<32x128xf32>
    %12 = arith.addf %9, %11 : vector<32x128xf32>
    %cst_11 = arith.constant 0.000000e+00 : f32
    %13 = vector.broadcast %cst_11 : f32 to vector<32x128xf32>
    %14 = arith.maximumf %12, %13 : vector<32x128xf32>
    %c0_12 = arith.constant 0 : index
    %c0_13 = arith.constant 0 : index
    %15 = vector.load %arg6[%c0_12, %c0_13] : memref<8x32xf32, #tpu.memory_space<vmem>>, vector<8x32xf32>
    %cst_14 = arith.constant dense<0.000000e+00> : vector<8x128xf32>
    %16 = tpu.matmul %15, %14, %cst_14 {dimension_numbers = #tpu.dot_dimension_numbers<[1], [0], [0], [1], [0, 0, 1, 1], [], []>} : vector<8x32xf32>, vector<32x128xf32>, vector<8x128xf32> -> vector<8x128xf32>
    %c0_15 = arith.constant 0 : index
    %c0_16 = arith.constant 0 : index
    %17 = vector.load %arg7[%c0_15, %c0_16] : memref<8x1xf32, #tpu.memory_space<vmem>>, vector<8x1xf32>
    %18 = vector.broadcast %17 : vector<8x1xf32> to vector<8x128xf32>
    %19 = arith.addf %16, %18 : vector<8x128xf32>
    %20 = vector.extract_strided_slice %19 {offsets = [0, 0], sizes = [4, 128], strides = [1, 1]} : vector<8x128xf32> to vector<4x128xf32>
    %c0_17 = arith.constant 0 : index
    %c0_18 = arith.constant 0 : index
    %21 = vector.load %arg8[%c0_17, %c0_18] : memref<4x128xf32, #tpu.memory_space<vmem>>, vector<4x128xf32>
    tpu.vector_store %arg8[%c0_17, %c0_18], %20 {strides = array<i32>} : memref<4x128xf32, #tpu.memory_space<vmem>>, vector<4x128xf32>,
    %22 = vector.extract_strided_slice %19 {offsets = [4, 0], sizes = [4, 128], strides = [1, 1]} : vector<8x128xf32> to vector<4x128xf32>
    %c0_19 = arith.constant 0 : index
    %c0_20 = arith.constant 0 : index
    %23 = vector.load %arg9[%c0_19, %c0_20] : memref<4x128xf32, #tpu.memory_space<vmem>>, vector<4x128xf32>
    tpu.vector_store %arg9[%c0_19, %c0_20], %22 {strides = array<i32>} : memref<4x128xf32, #tpu.memory_space<vmem>>, vector<4x128xf32>,
    %c0_21 = arith.constant 0 : index
    %c0_22 = arith.constant 0 : index
    %24 = vector.load %arg10[%c0_21, %c0_22] : memref<32x128xf32, #tpu.memory_space<vmem>>, vector<32x128xf32>
    tpu.vector_store %arg10[%c0_21, %c0_22], %7 {strides = array<i32>} : memref<32x128xf32, #tpu.memory_space<vmem>>, vector<32x128xf32>,
    return
  }
  func.func @transform_0(%arg0: i32) -> (i32, i32) {
    %c0_i32 = arith.constant 0 : i32
    %c0_i32_0 = arith.constant 0 : i32
    return %c0_i32, %arg0 : i32, i32
  }
  func.func @transform_1(%arg0: i32) -> (i32, i32) {
    %c0_i32 = arith.constant 0 : i32
    %c0_i32_0 = arith.constant 0 : i32
    %c0_i32_1 = arith.constant 0 : i32
    return %c0_i32, %c0_i32_0 : i32, i32
  }
  func.func @transform_2(%arg0: i32) -> (i32, i32) {
    %c0_i32 = arith.constant 0 : i32
    %c0_i32_0 = arith.constant 0 : i32
    %c0_i32_1 = arith.constant 0 : i32
    return %c0_i32, %c0_i32_0 : i32, i32
  }
  func.func @transform_3(%arg0: i32) -> (i32, i32) {
    %c0_i32 = arith.constant 0 : i32
    %c0_i32_0 = arith.constant 0 : i32
    %c0_i32_1 = arith.constant 0 : i32
    return %c0_i32, %c0_i32_0 : i32, i32
  }
  func.func @transform_4(%arg0: i32) -> (i32, i32) {
    %c0_i32 = arith.constant 0 : i32
    %c0_i32_0 = arith.constant 0 : i32
    %c0_i32_1 = arith.constant 0 : i32
    return %c0_i32, %c0_i32_0 : i32, i32
  }
  func.func @transform_5(%arg0: i32) -> (i32, i32) {
    %c0_i32 = arith.constant 0 : i32
    %c0_i32_0 = arith.constant 0 : i32
    %c0_i32_1 = arith.constant 0 : i32
    return %c0_i32, %c0_i32_0 : i32, i32
  }
  func.func @transform_6(%arg0: i32) -> (i32, i32) {
    %c0_i32 = arith.constant 0 : i32
    %c0_i32_0 = arith.constant 0 : i32
    %c0_i32_1 = arith.constant 0 : i32
    return %c0_i32, %c0_i32_0 : i32, i32
  }
  func.func @transform_7(%arg0: i32) -> (i32, i32) {
    %c0_i32 = arith.constant 0 : i32
    %c0_i32_0 = arith.constant 0 : i32
    return %c0_i32, %arg0 : i32, i32
  }
  func.func @transform_8(%arg0: i32) -> (i32, i32) {
    %c0_i32 = arith.constant 0 : i32
    %c0_i32_0 = arith.constant 0 : i32
    return %c0_i32, %arg0 : i32, i32
  }
  func.func @transform_9(%arg0: i32) -> (i32, i32) {
    %c0_i32 = arith.constant 0 : i32
    %c0_i32_0 = arith.constant 0 : i32
    return %c0_i32, %arg0 : i32, i32
  }
}

</mosaic_0001>

<llo_original>
// kernel: tpu_custom_call.1
$region0: #{tpu_custom_call.1}
  #allocation0 [shape = 'u32[]', space=smem, size = 0x4, offset = 0x4, fixed_abs, tag = 'smem constant byte address 0x4 - core index']
  #allocation1 [shape = 'u32[144,128]{1,0:T(1,128)}', space=vmem, size = 0x12000, scoped, tag = 'internal scratch']
  %s0 = inlined_call_operand.vmem [shape: f32[16,256], index: 0, kind: input, shape index: {}]
  %s1 = inlined_call_operand.vmem [shape: f32[32,16], index: 1, kind: input, shape index: {}]
  %s2 = inlined_call_operand.vmem [shape: f32[32,1], index: 2, kind: input, shape index: {}]
  %s3 = inlined_call_operand.vmem [shape: f32[32,32], index: 3, kind: input, shape index: {}]
  %s4 = inlined_call_operand.vmem [shape: f32[32,1], index: 4, kind: input, shape index: {}]
  %s5 = inlined_call_operand.vmem [shape: f32[8,32], index: 5, kind: input, shape index: {}]
  %s6 = inlined_call_operand.vmem [shape: f32[8,1], index: 6, kind: input, shape index: {}]
  %s7 = inlined_call_operand.hbm [shape: f32[4,256], index: 7, kind: output, shape index: {0}]
  %s8 = inlined_call_operand.hbm [shape: f32[4,256], index: 8, kind: output, shape index: {1}]
  %s9 = inlined_call_operand.hbm [shape: f32[32,256], index: 9, kind: output, shape index: {2}]
  %10 = xla_tuple %s7, %s8, %s9
  %s11 = sld [smem:[#allocation0]]
  $region115: #{tpu_custom_call.1} parent=0
    _
  %s13 = ssub.s32 1, %s11
  %s14 = scalar_select 0, %s13, %s11
  $region1: #{tpu_custom_call.1} parent=0
    #allocation2 [shape = 'u8[16384]{0}', space=vmem, size = 0x4000, scoped, tag = 'input window, operand 0']
    #allocation3 [shape = 'u8[4096]{0}', space=vmem, size = 0x1000, scoped, tag = 'output window, operand 0']
    #allocation4 [shape = 's32[2]{0}', space=sflag, size = 0x8, scoped, tag = 'scoped memory for tpu_custom_call.1']
    #allocation5 [shape = 'u8[4096]{0}', space=vmem, size = 0x1000, scoped, tag = 'output window, operand 1']
    #allocation6 [shape = 's32[2]{0}', space=sflag, size = 0x8, scoped, tag = 'scoped memory for tpu_custom_call.1']
    #allocation7 [shape = 'u8[32768]{0}', space=vmem, size = 0x8000, scoped, tag = 'output window, operand 2']
    %15 = vsyncpa [#allocation4], 0
    %s16 = scalar_lea.sflag [#allocation4], 1
    %17 = vsyncpa %s16, 0
    %18 = vsyncpa [#allocation6], 0
    %s19 = scalar_lea.sflag [#allocation6], 1
    %20 = vsyncpa %s19, 0
    loop: start=0, step=1, limit=4
    $region2: #{tpu_custom_call.1} parent=1 // loop_pre_header
      _
    $region3: #{tpu_custom_call.1} parent=1 // loop_header
      %s22 = sphi 0, %s26
      %p23 = scmp.ge.s32.totalorder %s22, 4
      %s32 = sphi 0, %s34
      %s35 = sphi 0, %s32
      %s36 = sphi 0, %s35
      %s52 = sphi 0, %s36
      %s56 = sphi 0, %s56
      %s58 = sphi 0, %s56
      %s59 = sphi 0, %s58
      %s73 = sphi 0, %s59
      %s77 = sphi 0, %s77
      %s79 = sphi 0, %s77
      %s80 = sphi 0, %s79
      %s94 = sphi 0, %s80
      %s98 = sphi 0, %s98
      %s100 = sphi 0, %s98
      %s101 = sphi 0, %s100
      %s115 = sphi 0, %s101
      %s119 = sphi 0, %s119
      %s121 = sphi 0, %s119
      %s122 = sphi 0, %s121
      %s136 = sphi 0, %s122
      %s140 = sphi 0, %s140
      %s142 = sphi 0, %s140
      %s143 = sphi 0, %s142
      %s157 = sphi 0, %s143
      %s161 = sphi 0, %s161
      %s163 = sphi 0, %s161
      %s164 = sphi 0, %s163
      %s178 = sphi 0, %s164
      %s184 = sphi 0, %s186
      %s187 = sphi 0, %s184
      %s188 = sphi 0, %s187
      %s204 = sphi 0, %s188
      %s210 = sphi 0, %s212
      %s213 = sphi 0, %s210
      %s214 = sphi 0, %s213
      %s230 = sphi 0, %s214
      %s236 = sphi 0, %s238
      %s239 = sphi 0, %s236
      %s240 = sphi 0, %s239
      %s256 = sphi 0, %s240
    $region4: #{tpu_custom_call.1} parent=1 // loop_header_branch
      %25 = sbr.rel (%p23) target = $region8
    $region5: #{tpu_custom_call.1} parent=1 // loop_body
      %s27 = ssub.s32 %s22, 1
      %s28 = ssub.s32 %s22, 2
      %s29 = sadd.s32 %s22, 1
      %s30 = ssub.s32 %s22, %s29
      %p31 = scmp.eq.s32.totalorder %s30, 0
      %s33 = sadd.s32 %s32, 1
      %s34 = scalar_select %p31, %s32, %s33
      %p37 = pneg %p31
      %p38 = scmp.eq.s32.totalorder %s22, 1
      %p39 = por %p37, %p38
      %p40 = scmp.ne.s32.totalorder %s32, %s35
      %p41 = scmp.eq.s32.totalorder %s22, 0
      %p42 = por %p40, %p41
      %p43 = scmp.ne.s32.totalorder %s32, %s35
      %p44 = scmp.eq.s32.totalorder %s27, 1
      %p45 = por %p43, %p44
      %p46 = scmp.ne.s32.totalorder %s35, %s36
      %p47 = scmp.eq.s32.totalorder %s27, 0
      %p48 = por %p46, %p47
      %p49 = scmp.ne.s32.totalorder %s35, %s36
      %p50 = scmp.eq.s32.totalorder %s28, 1
      %p51 = por %p49, %p50
      %p53 = scmp.ne.s32.totalorder %s36, %s52
      %p54 = scmp.eq.s32.totalorder %s28, 0
      %p55 = por %p53, %p54
      %s57 = sadd.s32 %s56, 1
      %p60 = scmp.eq.s32.totalorder %s22, 1
      %p61 = scmp.ne.s32.totalorder %s56, %s58
      %p62 = scmp.eq.s32.totalorder %s22, 0
      %p63 = por %p61, %p62
      %p64 = scmp.ne.s32.totalorder %s56, %s58
      %p65 = scmp.eq.s32.totalorder %s27, 1
      %p66 = por %p64, %p65
      %p67 = scmp.ne.s32.totalorder %s58, %s59
      %p68 = scmp.eq.s32.totalorder %s27, 0
      %p69 = por %p67, %p68
      %p70 = scmp.ne.s32.totalorder %s58, %s59
      %p71 = scmp.eq.s32.totalorder %s28, 1
      %p72 = por %p70, %p71
      %p74 = scmp.ne.s32.totalorder %s59, %s73
      %p75 = scmp.eq.s32.totalorder %s28, 0
      %p76 = por %p74, %p75
      %s78 = sadd.s32 %s77, 1
      %p81 = scmp.eq.s32.totalorder %s22, 1
      %p82 = scmp.ne.s32.totalorder %s77, %s79
      %p83 = scmp.eq.s32.totalorder %s22, 0
      %p84 = por %p82, %p83
      %p85 = scmp.ne.s32.totalorder %s77, %s79
      %p86 = scmp.eq.s32.totalorder %s27, 1
      %p87 = por %p85, %p86
      %p88 = scmp.ne.s32.totalorder %s79, %s80
      %p89 = scmp.eq.s32.totalorder %s27, 0
      %p90 = por %p88, %p89
      %p91 = scmp.ne.s32.totalorder %s79, %s80
      %p92 = scmp.eq.s32.totalorder %s28, 1
      %p93 = por %p91, %p92
      %p95 = scmp.ne.s32.totalorder %s80, %s94
      %p96 = scmp.eq.s32.totalorder %s28, 0
      %p97 = por %p95, %p96
      %s99 = sadd.s32 %s98, 1
      %p102 = scmp.eq.s32.totalorder %s22, 1
      %p103 = scmp.ne.s32.totalorder %s98, %s100
      %p104 = scmp.eq.s32.totalorder %s22, 0
      %p105 = por %p103, %p104
      %p106 = scmp.ne.s32.totalorder %s98, %s100
      %p107 = scmp.eq.s32.totalorder %s27, 1
      %p108 = por %p106, %p107
      %p109 = scmp.ne.s32.totalorder %s100, %s101
      %p110 = scmp.eq.s32.totalorder %s27, 0
      %p111 = por %p109, %p110
      %p112 = scmp.ne.s32.totalorder %s100, %s101
      %p113 = scmp.eq.s32.totalorder %s28, 1
      %p114 = por %p112, %p113
      %p116 = scmp.ne.s32.totalorder %s101, %s115
      %p117 = scmp.eq.s32.totalorder %s28, 0
      %p118 = por %p116, %p117
      %s120 = sadd.s32 %s119, 1
      %p123 = scmp.eq.s32.totalorder %s22, 1
      %p124 = scmp.ne.s32.totalorder %s119, %s121
      %p125 = scmp.eq.s32.totalorder %s22, 0
      %p126 = por %p124, %p125
      %p127 = scmp.ne.s32.totalorder %s119, %s121
      %p128 = scmp.eq.s32.totalorder %s27, 1
      %p129 = por %p127, %p128
      %p130 = scmp.ne.s32.totalorder %s121, %s122
      %p131 = scmp.eq.s32.totalorder %s27, 0
      %p132 = por %p130, %p131
      %p133 = scmp.ne.s32.totalorder %s121, %s122
      %p134 = scmp.eq.s32.totalorder %s28, 1
      %p135 = por %p133, %p134
      %p137 = scmp.ne.s32.totalorder %s122, %s136
      %p138 = scmp.eq.s32.totalorder %s28, 0
      %p139 = por %p137, %p138
      %s141 = sadd.s32 %s140, 1
      %p144 = scmp.eq.s32.totalorder %s22, 1
      %p145 = scmp.ne.s32.totalorder %s140, %s142
      %p146 = scmp.eq.s32.totalorder %s22, 0
      %p147 = por %p145, %p146
      %p148 = scmp.ne.s32.totalorder %s140, %s142
      %p149 = scmp.eq.s32.totalorder %s27, 1
      %p150 = por %p148, %p149
      %p151 = scmp.ne.s32.totalorder %s142, %s143
      %p152 = scmp.eq.s32.totalorder %s27, 0
      %p153 = por %p151, %p152
      %p154 = scmp.ne.s32.totalorder %s142, %s143
      %p155 = scmp.eq.s32.totalorder %s28, 1
      %p156 = por %p154, %p155
      %p158 = scmp.ne.s32.totalorder %s143, %s157
      %p159 = scmp.eq.s32.totalorder %s28, 0
      %p160 = por %p158, %p159
      %s162 = sadd.s32 %s161, 1
      %p165 = scmp.eq.s32.totalorder %s22, 1
      %p166 = scmp.ne.s32.totalorder %s161, %s163
      %p167 = scmp.eq.s32.totalorder %s22, 0
      %p168 = por %p166, %p167
      %p169 = scmp.ne.s32.totalorder %s161, %s163
      %p170 = scmp.eq.s32.totalorder %s27, 1
      %p171 = por %p169, %p170
      %p172 = scmp.ne.s32.totalorder %s163, %s164
      %p173 = scmp.eq.s32.totalorder %s27, 0
      %p174 = por %p172, %p173
      %p175 = scmp.ne.s32.totalorder %s163, %s164
      %p176 = scmp.eq.s32.totalorder %s28, 1
      %p177 = por %p175, %p176
      %p179 = scmp.ne.s32.totalorder %s164, %s178
      %p180 = scmp.eq.s32.totalorder %s28, 0
      %p181 = por %p179, %p180
      %s182 = ssub.s32 %s22, %s29
      %p183 = scmp.eq.s32.totalorder %s182, 0
      %s185 = sadd.s32 %s184, 1
      %s186 = scalar_select %p183, %s184, %s185
      %p189 = pneg %p183
      %p190 = scmp.eq.s32.totalorder %s22, 1
      %p191 = por %p189, %p190
      %p192 = scmp.ne.s32.totalorder %s184, %s187
      %p193 = scmp.eq.s32.totalorder %s22, 0
      %p194 = por %p192, %p193
      %p195 = scmp.ne.s32.totalorder %s184, %s187
      %p196 = scmp.eq.s32.totalorder %s27, 1
      %p197 = por %p195, %p196
      %p198 = scmp.ne.s32.totalorder %s187, %s188
      %p199 = scmp.eq.s32.totalorder %s27, 0
      %p200 = por %p198, %p199
      %p201 = scmp.ne.s32.totalorder %s187, %s188
      %p202 = scmp.eq.s32.totalorder %s28, 1
      %p203 = por %p201, %p202
      %p205 = scmp.ne.s32.totalorder %s188, %s204
      %p206 = scmp.eq.s32.totalorder %s28, 0
      %p207 = por %p205, %p206
      %s208 = ssub.s32 %s22, %s29
      %p209 = scmp.eq.s32.totalorder %s208, 0
      %s211 = sadd.s32 %s210, 1
      %s212 = scalar_select %p209, %s210, %s211
      %p215 = pneg %p209
      %p216 = scmp.eq.s32.totalorder %s22, 1
      %p217 = por %p215, %p216
      %p218 = scmp.ne.s32.totalorder %s210, %s213
      %p219 = scmp.eq.s32.totalorder %s22, 0
      %p220 = por %p218, %p219
      %p221 = scmp.ne.s32.totalorder %s210, %s213
      %p222 = scmp.eq.s32.totalorder %s27, 1
      %p223 = por %p221, %p222
      %p224 = scmp.ne.s32.totalorder %s213, %s214
      %p225 = scmp.eq.s32.totalorder %s27, 0
      %p226 = por %p224, %p225
      %p227 = scmp.ne.s32.totalorder %s213, %s214
      %p228 = scmp.eq.s32.totalorder %s28, 1
      %p229 = por %p227, %p228
      %p231 = scmp.ne.s32.totalorder %s214, %s230
      %p232 = scmp.eq.s32.totalorder %s28, 0
      %p233 = por %p231, %p232
      %s234 = ssub.s32 %s22, %s29
      %p235 = scmp.eq.s32.totalorder %s234, 0
      %s237 = sadd.s32 %s236, 1
      %s238 = scalar_select %p235, %s236, %s237
      %p241 = pneg %p235
      %p242 = scmp.eq.s32.totalorder %s22, 1
      %p243 = por %p241, %p242
      %p244 = scmp.ne.s32.totalorder %s236, %s239
      %p245 = scmp.eq.s32.totalorder %s22, 0
      %p246 = por %p244, %p245
      %p247 = scmp.ne.s32.totalorder %s236, %s239
      %p248 = scmp.eq.s32.totalorder %s27, 1
      %p249 = por %p247, %p248
      %p250 = scmp.ne.s32.totalorder %s239, %s240
      %p251 = scmp.eq.s32.totalorder %s27, 0
      %p252 = por %p250, %p251
      %p253 = scmp.ne.s32.totalorder %s239, %s240
      %p254 = scmp.eq.s32.totalorder %s28, 1
      %p255 = por %p253, %p254
      %p257 = scmp.ne.s32.totalorder %s240, %s256
      %p258 = scmp.eq.s32.totalorder %s28, 0
      %p259 = por %p257, %p258
      %p260 = scmp.le.s32.totalorder 1, %s22
      %p261 = scmp.lt.s32.totalorder %s22, 3
      %p262 = pnand %p260, %p261
      %p263 = pneg %p262
      // Predicated region
      $region9: #{tpu_custom_call.1} parent=5 // pred_check
        _
      $region10: #{tpu_custom_call.1} parent=5 // pred_check_branch
        %265 = sbr.rel (%p262) target = $region12
      $region11: #{tpu_custom_call.1} parent=5 // pred_region
        %s266 = ssub.s32 %s22, 1
        // Predicated region
        $region13: #{tpu_custom_call.1} parent=11 // pred_check
          %p267 = pneg %p69
        $region14: #{tpu_custom_call.1} parent=11 // pred_check_branch
          %269 = sbr.rel (%p267) target = $region16
        $region15: #{tpu_custom_call.1} parent=11 // pred_region
          _
        $region16: #{tpu_custom_call.1} parent=11 // pred_fallthru
          _
        // Predicated region
        $region17: #{tpu_custom_call.1} parent=11 // pred_check
          %p270 = pneg %p90
        $region18: #{tpu_custom_call.1} parent=11 // pred_check_branch
          %272 = sbr.rel (%p270) target = $region20
        $region19: #{tpu_custom_call.1} parent=11 // pred_region
          _
        $region20: #{tpu_custom_call.1} parent=11 // pred_fallthru
          _
        // Predicated region
        $region21: #{tpu_custom_call.1} parent=11 // pred_check
          %p273 = pneg %p111
        $region22: #{tpu_custom_call.1} parent=11 // pred_check_branch
          %275 = sbr.rel (%p273) target = $region24
        $region23: #{tpu_custom_call.1} parent=11 // pred_region
          _
        $region24: #{tpu_custom_call.1} parent=11 // pred_fallthru
          _
        // Predicated region
        $region25: #{tpu_custom_call.1} parent=11 // pred_check
          %p276 = pneg %p132
        $region26: #{tpu_custom_call.1} parent=11 // pred_check_branch
          %278 = sbr.rel (%p276) target = $region28
        $region27: #{tpu_custom_call.1} parent=11 // pred_region
          _
        $region28: #{tpu_custom_call.1} parent=11 // pred_fallthru
          _
        // Predicated region
        $region29: #{tpu_custom_call.1} parent=11 // pred_check
          %p279 = pneg %p153
        $region30: #{tpu_custom_call.1} parent=11 // pred_check_branch
          %281 = sbr.rel (%p279) target = $region32
        $region31: #{tpu_custom_call.1} parent=11 // pred_region
          _
        $region32: #{tpu_custom_call.1} parent=11 // pred_fallthru
          _
        // Predicated region
        $region33: #{tpu_custom_call.1} parent=11 // pred_check
          %p282 = pneg %p174
        $region34: #{tpu_custom_call.1} parent=11 // pred_check_branch
          %284 = sbr.rel (%p282) target = $region36
        $region35: #{tpu_custom_call.1} parent=11 // pred_region
          _
        $region36: #{tpu_custom_call.1} parent=11 // pred_fallthru
          _
      $region12: #{tpu_custom_call.1} parent=5 // pred_fallthru
        _
      %p285 = scmp.lt.s32.totalorder %s22, 2
      // Predicated region
      $region37: #{tpu_custom_call.1} parent=5 // pred_check
        %p286 = pneg %p285
      $region38: #{tpu_custom_call.1} parent=5 // pred_check_branch
        %288 = sbr.rel (%p286) target = $region40
      $region39: #{tpu_custom_call.1} parent=5 // pred_region
        // Predicated region
        $region41: #{tpu_custom_call.1} parent=39 // pred_check
          %p289 = pneg %p42
        $region42: #{tpu_custom_call.1} parent=39 // pred_check_branch
          %291 = sbr.rel (%p289) target = $region44
        $region43: #{tpu_custom_call.1} parent=39 // pred_region
          %s292 = sand.u32 %s32, 1
          %s293 = sand.u32 %s32, 1
          %s294 = smul.addr %s293, 16
          %s295 = scalar_lea.vmem [#allocation2], %s294
          %s296 = smul.addr %s22, 8
          %s297 = scalar_lea.vmem %s0, %s296
          // Predicated region
          $region45: #{tpu_custom_call.1} parent=43 // pred_check
            _
          $region46: #{tpu_custom_call.1} parent=43 // pred_check_branch
            %299 = sbr.rel (0) target = $region48
          $region47: #{tpu_custom_call.1} parent=43 // pred_region
            // Predicated region
            $region49: #{tpu_custom_call.1} parent=47 // pred_check
              _
            $region50: #{tpu_custom_call.1} parent=47 // pred_check_branch
              %301 = sbr.rel (0) target = $region52
            $region51: #{tpu_custom_call.1} parent=47 // pred_region
              // Predicated region
              $region64: #{tpu_custom_call.1} parent=51 // pred_check
                _
              $region65: #{tpu_custom_call.1} parent=51 // pred_check_branch
                %318 = sbr.rel (0) target = $region67
              $region66: #{tpu_custom_call.1} parent=51 // pred_region
                loop: start=0, step=1, limit=1
                $region68: #{tpu_custom_call.1} parent=66 // loop_pre_header
                  _
                $region69: #{tpu_custom_call.1} parent=66 // loop_header
                  %s320 = sphi 0, %s324
                  %p321 = scmp.ge.s32.totalorder %s320, 1
                  %s325 = sphi %s297, %s297
                  %s326 = sphi %s295, %s295
                $region70: #{tpu_custom_call.1} parent=66 // loop_header_branch
                  %323 = sbr.rel (%p321) target = $region74
                $region71: #{tpu_custom_call.1} parent=66 // loop_body
                  %v327 = vld [vmem:[%s325] sm:$0xff]
                  %328 = vst [vmem:[%s326] sm:$0xff] %v327
                  %v329 = vld [vmem:[%s325 + $0x10] sm:$0xff]
                  %330 = vst [vmem:[%s326 + $0x8] sm:$0xff] %v329
                $region72: #{tpu_custom_call.1} parent=66 // loop_footer
                  %s324 = sadd.s32 1, %s320
                $region73: #{tpu_custom_call.1} parent=66 // loop_footer_branch
                  %319 = sbr.rel target = $region69
                $region74: #{tpu_custom_call.1} parent=66 // loop_exit
                  _
              $region67: #{tpu_custom_call.1} parent=51 // pred_fallthru
                _
              // Predicated region
              $region75: #{tpu_custom_call.1} parent=51 // pred_check
                _
              $region76: #{tpu_custom_call.1} parent=51 // pred_check_branch
                %332 = sbr.rel target = $region78
              $region77: #{tpu_custom_call.1} parent=51 // pred_region
                _
              $region78: #{tpu_custom_call.1} parent=51 // pred_fallthru
                _
            $region52: #{tpu_custom_call.1} parent=47 // pred_fallthru
              _
            // Predicated region
            $region53: #{tpu_custom_call.1} parent=47 // pred_check
              _
            $region54: #{tpu_custom_call.1} parent=47 // pred_check_branch
              %303 = sbr.rel target = $region56
            $region55: #{tpu_custom_call.1} parent=47 // pred_region
              loop: start=0, step=1, limit=1
              $region57: #{tpu_custom_call.1} parent=55 // loop_pre_header
                _
              $region58: #{tpu_custom_call.1} parent=55 // loop_header
                %s306 = sphi 0, %s310
                %p307 = scmp.ge.s32.totalorder %s306, 1
                %s311 = sphi %s297, %s297
                %s312 = sphi %s295, %s295
              $region59: #{tpu_custom_call.1} parent=55 // loop_header_branch
                %309 = sbr.rel (%p307) target = $region63
              $region60: #{tpu_custom_call.1} parent=55 // loop_body
                %v313 = vld [vmem:[%s311] sm:$0xff]
                %314 = vst [vmem:[%s312] sm:$0xff] %v313
                %v315 = vld [vmem:[%s311 + $0x10] sm:$0xff]
                %316 = vst [vmem:[%s312 + $0x8] sm:$0xff] %v315
              $region61: #{tpu_custom_call.1} parent=55 // loop_footer
                %s310 = sadd.s32 1, %s306
              $region62: #{tpu_custom_call.1} parent=55 // loop_footer_branch
                %305 = sbr.rel target = $region58
              $region63: #{tpu_custom_call.1} parent=55 // loop_exit
                _
            $region56: #{tpu_custom_call.1} parent=47 // pred_fallthru
              _
          $region48: #{tpu_custom_call.1} parent=43 // pred_fallthru
            _
          %333 = vnop
        $region44: #{tpu_custom_call.1} parent=39 // pred_fallthru
          _
      $region40: #{tpu_custom_call.1} parent=5 // pred_fallthru
        _
      %p334 = scmp.le.s32.totalorder 1, %s22
      %p335 = scmp.lt.s32.totalorder %s22, 3
      %p336 = pnand %p334, %p335
      %p337 = pneg %p336
      // Predicated region
      $region79: #{tpu_custom_call.1} parent=5 // pred_check
        _
      $region80: #{tpu_custom_call.1} parent=5 // pred_check_branch
        %339 = sbr.rel (%p336) target = $region82
      $region81: #{tpu_custom_call.1} parent=5 // pred_region
        %s340 = ssub.s32 %s22, 1
        %s341 = sand.u32 %s35, 1
        %s342 = sand.u32 %s35, 1
        %s343 = smul.addr %s342, 16
        %s344 = scalar_lea.vmem [#allocation2], %s343
        // Predicated region
        $region83: #{tpu_custom_call.1} parent=81 // pred_check
          %p345 = pneg %p48
        $region84: #{tpu_custom_call.1} parent=81 // pred_check_branch
          %347 = sbr.rel (%p345) target = $region86
        $region85: #{tpu_custom_call.1} parent=81 // pred_region
          _
        $region86: #{tpu_custom_call.1} parent=81 // pred_fallthru
          _
        %s348 = sand.u32 %s35, 1
        %s349 = sand.u32 %s35, 1
        %s350 = smul.addr %s349, 16
        %s351 = scalar_lea.vmem [#allocation2], %s350
        %p352 = pneg %p48
        %p353 = pneg %p45
        %p354 = pneg %p69
        %p355 = pneg %p66
        %p356 = pneg %p90
        %p357 = pneg %p87
        %p358 = pneg %p111
        %p359 = pneg %p108
        %p360 = pneg %p132
        %p361 = pneg %p129
        %p362 = pneg %p153
        %p363 = pneg %p150
        %p364 = pneg %p174
        %p365 = pneg %p171
        %p366 = pneg %p200
        %p367 = pneg %p197
        %s368 = sand.u32 %s187, 1
        %s369 = scalar_lea.sflag [#allocation4], %s368
        %s370 = sand.u32 %s187, 1
        %s371 = smul.addr %s370, 4
        %s372 = scalar_lea.vmem [#allocation3], %s371
        %p373 = pneg %p226
        %p374 = pneg %p223
        %s375 = sand.u32 %s27, 1
        %s376 = scalar_lea.sflag [#allocation6], %s375
        %s377 = sand.u32 %s213, 1
        %s378 = smul.addr %s377, 4
        %s379 = scalar_lea.vmem [#allocation5], %s378
        %p380 = pneg %p252
        %p381 = pneg %p249
        %s382 = sand.u32 %s27, 1
        %s383 = scalar_lea.sflag [#allocation6], %s382
        %s384 = sand.u32 %s239, 1
        %s385 = smul.addr %s384, 32
        %s386 = scalar_lea.vmem [#allocation7], %s385
        %v387 = vld [vmem:[%s344] sm:$0xff]
        %v388 = vld [vmem:[%s344 + $0x8] sm:$0xff]
        %v389 = vld [vmem:[%s1] sm:$0xff]
        %v390 = vld [vmem:[%s1 + $0x8] sm:$0xff]
        %v391 = vld [vmem:[%s1 + $0x10] sm:$0xff]
        %v392 = vld [vmem:[%s1 + $0x18] sm:$0xff]
        %v393 = vld [vmem:[%s2] sm:$0xff]
        %v394 = vld [vmem:[%s2 + $0x8] sm:$0xff]
        %v395 = vld [vmem:[%s2 + $0x10] sm:$0xff]
        %v396 = vld [vmem:[%s2 + $0x18] sm:$0xff]
        %398 = vset.pattern.permute.xlu0 0
        %399 = vperm.xlu0 %398, %v393
        %v400 = vpop.permute.xlu0 %399
        %403 = vset.pattern.permute.xlu0 0
        %404 = vperm.xlu0 %403, %v394
        %v405 = vpop.permute.xlu0 %404
        %408 = vset.pattern.permute.xlu0 0
        %409 = vperm.xlu0 %408, %v395
        %v410 = vpop.permute.xlu0 %409
        %413 = vset.pattern.permute.xlu0 0
        %414 = vperm.xlu0 %413, %v396
        %v415 = vpop.permute.xlu0 %414
        %vm417 = vcmask 130048
        %v419 = vsel %vm417, %v389, 0
        %v422 = vsel %vm417, %v390, 0
        %v425 = vsel %vm417, %v391, 0
        %v428 = vsel %vm417, %v392, 0
        %430 = vmatprep.subr.mxu0 0.0
        %431 = vmatpush1.msra.mxu0 %v387
        %432 = vmatprep.subr.mxu0 0.0
        %433 = vmatpush1.msra.mxu0 %v388
        %434 = vmatprep.subr.mxu0 0.0
        %435 = vmatpush1.msra.mxu0 0.0
        %436 = vmatprep.subr.mxu0 0.0
        %437 = vmatpush1.msra.mxu0 0.0
        %438 = vmatprep.subr.mxu0 0.0
        %439 = vmatpush1.msra.mxu0 0.0
        %440 = vmatprep.subr.mxu0 0.0
        %441 = vmatpush1.msra.mxu0 0.0
        %442 = vmatprep.subr.mxu0 0.0
        %443 = vmatpush1.msra.mxu0 0.0
        %444 = vmatprep.subr.mxu0 0.0
        %445 = vmatpush1.msra.mxu0 0.0
        %446 = vmatprep.subr.mxu0 0.0
        %447 = vmatpush1.msra.mxu0 0.0
        %448 = vmatprep.subr.mxu0 0.0
        %449 = vmatpush1.msra.mxu0 0.0
        %450 = vmatprep.subr.mxu0 0.0
        %451 = vmatpush1.msra.mxu0 0.0
        %452 = vmatprep.subr.mxu0 0.0
        %453 = vmatpush1.msra.mxu0 0.0
        %454 = vmatprep.subr.mxu0 0.0
        %455 = vmatpush1.msra.mxu0 0.0
        %456 = vmatprep.subr.mxu0 0.0
        %457 = vmatpush1.msra.mxu0 0.0
        %458 = vmatprep.subr.mxu0 0.0
        %459 = vmatpush1.msra.mxu0 0.0
        %460 = vmatprep.subr.mxu0 0.0
        %461 = vmatpush1.msra.mxu0 0.0
        %462 = vmatprep.subr.mxu0 0.0
        %463 = vmatpush1.msra.mxu0 0.0
        %464 = vmatprep.subr.mxu0 0.0
        %465 = vmatpush1.msra.mxu0 0.0
        %466 = vmatprep.subr.mxu0 0.0
        %467 = vmatpush1.msra.mxu0 0.0
        %468 = vmatprep.subr.mxu0 0.0
        %469 = vmatpush1.msra.mxu0 0.0
        %470 = vmatprep.subr.mxu0 0.0
        %471 = vmatpush1.msra.mxu0 0.0
        %472 = vmatprep.subr.mxu0 0.0
        %473 = vmatpush1.msra.mxu0 0.0
        %474 = vmatprep.subr.mxu0 0.0
        %475 = vmatpush1.msra.mxu0 0.0
        %476 = vmatprep.subr.mxu0 0.0
        %477 = vmatpush1.msra.mxu0 0.0
        %478 = vmatprep.subr.mxu0 0.0
        %479 = vmatpush1.msra.mxu0 0.0
        %480 = vmatprep.subr.mxu0 0.0
        %481 = vmatpush1.msra.mxu0 0.0
        %482 = vmatprep.subr.mxu0 0.0
        %483 = vmatpush1.msra.mxu0 0.0
        %484 = vmatprep.subr.mxu0 0.0
        %485 = vmatpush1.msra.mxu0 0.0
        %486 = vmatprep.subr.mxu0 0.0
        %487 = vmatpush1.msra.mxu0 0.0
        %488 = vmatprep.subr.mxu0 0.0
        %489 = vmatpush1.msra.mxu0 0.0
        %490 = vmatprep.subr.mxu0 0.0
        %491 = vmatpush1.msra.mxu0 0.0
        %492 = vmatprep.subr.mxu0 0.0
        %493 = vmatpush1.msra.mxu0 0.0
        %494 = vmatprep.mubr.f32.mxu0 0.0
        %495 = vmatmul.mubr.f32.gmra.mrb[0].mxu0 %v419
        %v496 = vpop.f32.mrb[0].mxu0
        %v497 = vadd.f32 %v400, %v496
        %v498 = vpop.f32.mrb[0].mxu0
        %499 = vmatprep.mubr.f32.mxu0 0.0
        %500 = vmatmul.mubr.f32.gmra.mrb[0].mxu0 %v422
        %v501 = vpop.f32.mrb[0].mxu0
        %v502 = vadd.f32 %v405, %v501
        %v503 = vpop.f32.mrb[0].mxu0
        %504 = vmatprep.mubr.f32.mxu0 0.0
        %505 = vmatmul.mubr.f32.gmra.mrb[0].mxu0 %v425
        %v506 = vpop.f32.mrb[0].mxu0
        %v507 = vadd.f32 %v410, %v506
        %v508 = vpop.f32.mrb[0].mxu0
        %509 = vmatprep.mubr.f32.mxu0 0.0
        %510 = vmatmul.mubr.f32.gmra.mrb[0].mxu0 %v428
        %v511 = vpop.f32.mrb[0].mxu0
        %v512 = vadd.f32 %v415, %v511
        %v513 = vpop.f32.mrb[0].mxu0
        %514 = vdwg.mxu0
        %v515 = vmax.f32 %v497, 0.0
        %v516 = vmax.f32 %v502, 0.0
        %v517 = vmax.f32 %v507, 0.0
        %v518 = vmax.f32 %v512, 0.0
        %v519 = vld [vmem:[%s3] sm:$0xff]
        %v520 = vld [vmem:[%s3 + $0x8] sm:$0xff]
        %v521 = vld [vmem:[%s3 + $0x10] sm:$0xff]
        %v522 = vld [vmem:[%s3 + $0x18] sm:$0xff]
        %v523 = vld [vmem:[%s4] sm:$0xff]
        %v524 = vld [vmem:[%s4 + $0x8] sm:$0xff]
        %v525 = vld [vmem:[%s4 + $0x10] sm:$0xff]
        %v526 = vld [vmem:[%s4 + $0x18] sm:$0xff]
        %528 = vset.pattern.permute.xlu0 0
        %529 = vperm.xlu0 %528, %v523
        %v530 = vpop.permute.xlu0 %529
        %533 = vset.pattern.permute.xlu0 0
        %534 = vperm.xlu0 %533, %v524
        %v535 = vpop.permute.xlu0 %534
        %538 = vset.pattern.permute.xlu0 0
        %539 = vperm.xlu0 %538, %v525
        %v540 = vpop.permute.xlu0 %539
        %543 = vset.pattern.permute.xlu0 0
        %544 = vperm.xlu0 %543, %v526
        %v545 = vpop.permute.xlu0 %544
        %vm547 = vcmask 261120
        %v549 = vsel %vm547, %v519, 0
        %v552 = vsel %vm547, %v520, 0
        %v555 = vsel %vm547, %v521, 0
        %v558 = vsel %vm547, %v522, 0
        %560 = vmatprep.subr.mxu0 0.0
        %561 = vmatpush1.msra.mxu0 %v515
        %562 = vmatprep.subr.mxu0 0.0
        %563 = vmatpush1.msra.mxu0 %v516
        %564 = vmatprep.subr.mxu0 0.0
        %565 = vmatpush1.msra.mxu0 %v517
        %566 = vmatprep.subr.mxu0 0.0
        %567 = vmatpush1.msra.mxu0 %v518
        %568 = vmatprep.subr.mxu0 0.0
        %569 = vmatpush1.msra.mxu0 0.0
        %570 = vmatprep.subr.mxu0 0.0
        %571 = vmatpush1.msra.mxu0 0.0
        %572 = vmatprep.subr.mxu0 0.0
        %573 = vmatpush1.msra.mxu0 0.0
        %574 = vmatprep.subr.mxu0 0.0
        %575 = vmatpush1.msra.mxu0 0.0
        %576 = vmatprep.subr.mxu0 0.0
        %577 = vmatpush1.msra.mxu0 0.0
        %578 = vmatprep.subr.mxu0 0.0
        %579 = vmatpush1.msra.mxu0 0.0
        %580 = vmatprep.subr.mxu0 0.0
        %581 = vmatpush1.msra.mxu0 0.0
        %582 = vmatprep.subr.mxu0 0.0
        %583 = vmatpush1.msra.mxu0 0.0
        %584 = vmatprep.subr.mxu0 0.0
        %585 = vmatpush1.msra.mxu0 0.0
        %586 = vmatprep.subr.mxu0 0.0
        %587 = vmatpush1.msra.mxu0 0.0
        %588 = vmatprep.subr.mxu0 0.0
        %589 = vmatpush1.msra.mxu0 0.0
        %590 = vmatprep.subr.mxu0 0.0
        %591 = vmatpush1.msra.mxu0 0.0
        %592 = vmatprep.subr.mxu0 0.0
        %593 = vmatpush1.msra.mxu0 0.0
        %594 = vmatprep.subr.mxu0 0.0
        %595 = vmatpush1.msra.mxu0 0.0
        %596 = vmatprep.subr.mxu0 0.0
        %597 = vmatpush1.msra.mxu0 0.0
        %598 = vmatprep.subr.mxu0 0.0
        %599 = vmatpush1.msra.mxu0 0.0
        %600 = vmatprep.subr.mxu0 0.0
        %601 = vmatpush1.msra.mxu0 0.0
        %602 = vmatprep.subr.mxu0 0.0
        %603 = vmatpush1.msra.mxu0 0.0
        %604 = vmatprep.subr.mxu0 0.0
        %605 = vmatpush1.msra.mxu0 0.0
        %606 = vmatprep.subr.mxu0 0.0
        %607 = vmatpush1.msra.mxu0 0.0
        %608 = vmatprep.subr.mxu0 0.0
        %609 = vmatpush1.msra.mxu0 0.0
        %610 = vmatprep.subr.mxu0 0.0
        %611 = vmatpush1.msra.mxu0 0.0
        %612 = vmatprep.subr.mxu0 0.0
        %613 = vmatpush1.msra.mxu0 0.0
        %614 = vmatprep.subr.mxu0 0.0
        %615 = vmatpush1.msra.mxu0 0.0
        %616 = vmatprep.subr.mxu0 0.0
        %617 = vmatpush1.msra.mxu0 0.0
        %618 = vmatprep.subr.mxu0 0.0
        %619 = vmatpush1.msra.mxu0 0.0
        %620 = vmatprep.subr.mxu0 0.0
        %621 = vmatpush1.msra.mxu0 0.0
        %622 = vmatprep.subr.mxu0 0.0
        %623 = vmatpush1.msra.mxu0 0.0
        %624 = vmatprep.mubr.f32.mxu0 0.0
        %625 = vmatmul.mubr.f32.gmra.mrb[0].mxu0 %v549
        %v626 = vpop.f32.mrb[0].mxu0
        %v627 = vadd.f32 %v530, %v626
        %v628 = vpop.f32.mrb[0].mxu0
        %629 = vmatprep.mubr.f32.mxu0 0.0
        %630 = vmatmul.mubr.f32.gmra.mrb[0].mxu0 %v552
        %v631 = vpop.f32.mrb[0].mxu0
        %v632 = vadd.f32 %v535, %v631
        %v633 = vpop.f32.mrb[0].mxu0
        %634 = vmatprep.mubr.f32.mxu0 0.0
        %635 = vmatmul.mubr.f32.gmra.mrb[0].mxu0 %v555
        %v636 = vpop.f32.mrb[0].mxu0
        %v637 = vadd.f32 %v540, %v636
        %v638 = vpop.f32.mrb[0].mxu0
        %639 = vmatprep.mubr.f32.mxu0 0.0
        %640 = vmatmul.mubr.f32.gmra.mrb[0].mxu0 %v558
        %v641 = vpop.f32.mrb[0].mxu0
        %v642 = vadd.f32 %v545, %v641
        %v643 = vpop.f32.mrb[0].mxu0
        %644 = vdwg.mxu0
        %v645 = vmax.f32 %v627, 0.0
        %v646 = vmax.f32 %v632, 0.0
        %v647 = vmax.f32 %v637, 0.0
        %v648 = vmax.f32 %v642, 0.0
        %v649 = vld [vmem:[%s5] sm:$0xff]
        %v650 = vld [vmem:[%s6] sm:$0xff]
        %652 = vset.pattern.permute.xlu0 0
        %653 = vperm.xlu0 %652, %v650
        %v654 = vpop.permute.xlu0 %653
        %v657 = vsel %vm547, %v649, 0
        %659 = vmatprep.subr.mxu0 0.0
        %660 = vmatpush1.msra.mxu0 %v645
        %661 = vmatprep.subr.mxu0 0.0
        %662 = vmatpush1.msra.mxu0 %v646
        %663 = vmatprep.subr.mxu0 0.0
        %664 = vmatpush1.msra.mxu0 %v647
        %665 = vmatprep.subr.mxu0 0.0
        %666 = vmatpush1.msra.mxu0 %v648
        %667 = vmatprep.subr.mxu0 0.0
        %668 = vmatpush1.msra.mxu0 0.0
        %669 = vmatprep.subr.mxu0 0.0
        %670 = vmatpush1.msra.mxu0 0.0
        %671 = vmatprep.subr.mxu0 0.0
        %672 = vmatpush1.msra.mxu0 0.0
        %673 = vmatprep.subr.mxu0 0.0
        %674 = vmatpush1.msra.mxu0 0.0
        %675 = vmatprep.subr.mxu0 0.0
        %676 = vmatpush1.msra.mxu0 0.0
        %677 = vmatprep.subr.mxu0 0.0
        %678 = vmatpush1.msra.mxu0 0.0
        %679 = vmatprep.subr.mxu0 0.0
        %680 = vmatpush1.msra.mxu0 0.0
        %681 = vmatprep.subr.mxu0 0.0
        %682 = vmatpush1.msra.mxu0 0.0
        %683 = vmatprep.subr.mxu0 0.0
        %684 = vmatpush1.msra.mxu0 0.0
        %685 = vmatprep.subr.mxu0 0.0
        %686 = vmatpush1.msra.mxu0 0.0
        %687 = vmatprep.subr.mxu0 0.0
        %688 = vmatpush1.msra.mxu0 0.0
        %689 = vmatprep.subr.mxu0 0.0
        %690 = vmatpush1.msra.mxu0 0.0
        %691 = vmatprep.subr.mxu0 0.0
        %692 = vmatpush1.msra.mxu0 0.0
        %693 = vmatprep.subr.mxu0 0.0
        %694 = vmatpush1.msra.mxu0 0.0
        %695 = vmatprep.subr.mxu0 0.0
        %696 = vmatpush1.msra.mxu0 0.0
        %697 = vmatprep.subr.mxu0 0.0
        %698 = vmatpush1.msra.mxu0 0.0
        %699 = vmatprep.subr.mxu0 0.0
        %700 = vmatpush1.msra.mxu0 0.0
        %701 = vmatprep.subr.mxu0 0.0
        %702 = vmatpush1.msra.mxu0 0.0
        %703 = vmatprep.subr.mxu0 0.0
        %704 = vmatpush1.msra.mxu0 0.0
        %705 = vmatprep.subr.mxu0 0.0
        %706 = vmatpush1.msra.mxu0 0.0
        %707 = vmatprep.subr.mxu0 0.0
        %708 = vmatpush1.msra.mxu0 0.0
        %709 = vmatprep.subr.mxu0 0.0
        %710 = vmatpush1.msra.mxu0 0.0
        %711 = vmatprep.subr.mxu0 0.0
        %712 = vmatpush1.msra.mxu0 0.0
        %713 = vmatprep.subr.mxu0 0.0
        %714 = vmatpush1.msra.mxu0 0.0
        %715 = vmatprep.subr.mxu0 0.0
        %716 = vmatpush1.msra.mxu0 0.0
        %717 = vmatprep.subr.mxu0 0.0
        %718 = vmatpush1.msra.mxu0 0.0
        %719 = vmatprep.subr.mxu0 0.0
        %720 = vmatpush1.msra.mxu0 0.0
        %721 = vmatprep.subr.mxu0 0.0
        %722 = vmatpush1.msra.mxu0 0.0
        %723 = vmatprep.mubr.f32.mxu0 0.0
        %724 = vmatmul.mubr.f32.gmra.mrb[0].mxu0 %v657
        %v725 = vpop.f32.mrb[0].mxu0
        %v726 = vadd.f32 %v654, %v725
        %v727 = vpop.f32.mrb[0].mxu0
        %728 = vdwg.mxu0
        %729 = vst [vmem:[%s372] sm:$0xf] %v726
        %730 = vst [vmem:[%s379 - $0x4] sm:$0xf0] %v726
        %731 = vst [vmem:[%s386] sm:$0xff] %v515
        %732 = vst [vmem:[%s386 + $0x8] sm:$0xff] %v516
        %733 = vst [vmem:[%s386 + $0x10] sm:$0xff] %v517
        %734 = vst [vmem:[%s386 + $0x18] sm:$0xff] %v518
        %s735 = sand.u32 %s187, 1
        %s736 = scalar_lea.sflag [#allocation4], %s735
        %s737 = sand.u32 %s187, 1
        %s738 = smul.addr %s737, 4
        %s739 = scalar_lea.vmem [#allocation3], %s738
        %s740 = sand.u32 %s27, 1
        %s741 = scalar_lea.sflag [#allocation6], %s740
        %s742 = sand.u32 %s213, 1
        %s743 = smul.addr %s742, 4
        %s744 = scalar_lea.vmem [#allocation5], %s743
        %s745 = sand.u32 %s27, 1
        %s746 = scalar_lea.sflag [#allocation6], %s745
        %s747 = sand.u32 %s239, 1
        %s748 = smul.addr %s747, 32
        %s749 = scalar_lea.vmem [#allocation7], %s748
        // Predicated region
        $region87: #{tpu_custom_call.1} parent=81 // pred_check
          %p750 = pneg %p197
        $region88: #{tpu_custom_call.1} parent=81 // pred_check_branch
          %752 = sbr.rel (%p750) target = $region90
        $region89: #{tpu_custom_call.1} parent=81 // pred_region
          %s754 = ssub.s32 64, 64
          %755 = vsyncadd %s736, %s754
          %s756 = smul.addr %s27, 64
          %s757 = scalar_lea.hbm %s7, %s756
          %s759 = sshll.u32 %s739, 4
          %s760 = int_to_ptr.vmem [resolvable:$true] %s759
          %762 = dma.vmem_to_hbm [thread:$0]  %s760, 64, %s757, %s736
        $region90: #{tpu_custom_call.1} parent=81 // pred_fallthru
          _
        // Predicated region
        $region91: #{tpu_custom_call.1} parent=81 // pred_check
          %p763 = pneg %p223
        $region92: #{tpu_custom_call.1} parent=81 // pred_check_branch
          %765 = sbr.rel (%p763) target = $region94
        $region93: #{tpu_custom_call.1} parent=81 // pred_region
          %s767 = ssub.s32 64, 64
          %768 = vsyncadd %s741, %s767
          %s769 = smul.addr %s27, 64
          %s770 = scalar_lea.hbm %s8, %s769
          %s772 = sshll.u32 %s744, 4
          %s773 = int_to_ptr.vmem [resolvable:$true] %s772
          %775 = dma.vmem_to_hbm [thread:$0]  %s773, 64, %s770, %s741
        $region94: #{tpu_custom_call.1} parent=81 // pred_fallthru
          _
        // Predicated region
        $region95: #{tpu_custom_call.1} parent=81 // pred_check
          %p776 = pneg %p249
        $region96: #{tpu_custom_call.1} parent=81 // pred_check_branch
          %778 = sbr.rel (%p776) target = $region98
        $region97: #{tpu_custom_call.1} parent=81 // pred_region
          %s780 = ssub.s32 512, 512
          %781 = vsyncadd %s746, %s780
          %s782 = smul.addr %s27, 128
          %s783 = scalar_lea.hbm %s9, %s782
          %s784 = sshll.u32 %s749, 4
          %s785 = int_to_ptr.vmem [resolvable:$true] %s784
          %790 = dma.vmem_to_hbm [thread:$0]  %s785, 512, %s783, %s746, 128, 256, 8
        $region98: #{tpu_custom_call.1} parent=81 // pred_fallthru
          _
      $region82: #{tpu_custom_call.1} parent=5 // pred_fallthru
        _
      %p791 = scmp.le.s32.totalorder 2, %s22
      // Predicated region
      $region99: #{tpu_custom_call.1} parent=5 // pred_check
        %p792 = pneg %p791
      $region100: #{tpu_custom_call.1} parent=5 // pred_check_branch
        %794 = sbr.rel (%p792) target = $region102
      $region101: #{tpu_custom_call.1} parent=5 // pred_region
        %s795 = ssub.s32 %s22, 2
        // Predicated region
        $region103: #{tpu_custom_call.1} parent=101 // pred_check
          %p796 = pneg %p203
        $region104: #{tpu_custom_call.1} parent=101 // pred_check_branch
          %798 = sbr.rel (%p796) target = $region106
        $region105: #{tpu_custom_call.1} parent=101 // pred_region
          %s799 = sand.u32 %s188, 1
          %s800 = scalar_lea.sflag [#allocation4], %s799
          %s801 = sand.u32 %s188, 1
          %s802 = smul.addr %s801, 4
          %s803 = scalar_lea.vmem [#allocation3], %s802
          %804 = dma.done %s800, 64
        $region106: #{tpu_custom_call.1} parent=101 // pred_fallthru
          _
        // Predicated region
        $region107: #{tpu_custom_call.1} parent=101 // pred_check
          %p805 = pneg %p229
        $region108: #{tpu_custom_call.1} parent=101 // pred_check_branch
          %807 = sbr.rel (%p805) target = $region110
        $region109: #{tpu_custom_call.1} parent=101 // pred_region
          %s808 = sand.u32 %s28, 1
          %s809 = scalar_lea.sflag [#allocation6], %s808
          %s810 = sand.u32 %s214, 1
          %s811 = smul.addr %s810, 4
          %s812 = scalar_lea.vmem [#allocation5], %s811
          %813 = dma.done %s809, 64
        $region110: #{tpu_custom_call.1} parent=101 // pred_fallthru
          _
        // Predicated region
        $region111: #{tpu_custom_call.1} parent=101 // pred_check
          %p814 = pneg %p255
        $region112: #{tpu_custom_call.1} parent=101 // pred_check_branch
          %816 = sbr.rel (%p814) target = $region114
        $region113: #{tpu_custom_call.1} parent=101 // pred_region
          %s817 = sand.u32 %s28, 1
          %s818 = scalar_lea.sflag [#allocation6], %s817
          %s819 = sand.u32 %s240, 1
          %s820 = smul.addr %s819, 32
          %s821 = scalar_lea.vmem [#allocation7], %s820
          %822 = dma.done %s818, 512
        $region114: #{tpu_custom_call.1} parent=101 // pred_fallthru
          _
      $region102: #{tpu_custom_call.1} parent=5 // pred_fallthru
        _
    $region6: #{tpu_custom_call.1} parent=1 // loop_footer
      %s26 = sadd.s32 1, %s22
    $region7: #{tpu_custom_call.1} parent=1 // loop_footer_branch
      %21 = sbr.rel target = $region3
    $region8: #{tpu_custom_call.1} parent=1 // loop_exit
      _
    %823 = vsyncpa [#allocation4], 1
    %s824 = scalar_lea.sflag [#allocation4], 1
    %825 = vsyncpa %s824, 1
    %826 = vsyncpa [#allocation6], 1
    %s827 = scalar_lea.sflag [#allocation6], 1
    %828 = vsyncpa %s827, 1

</llo_original>
